<compile_context>
chip_gen: v7x
topology: tpu7x:2x2x1
jax: 0.10.0
libtpu: 0.0.40
codegen_flags: <defaults>
</compile_context>

<pallas_src>
import functools

import jax
import jax.numpy as jnp
from jax.experimental import pallas as pl
from jax.experimental.pallas import tpu as pltpu


# ---------------------------------------------------------------------------
# Tiling helpers.  The op is purely elementwise (HBM-bandwidth bound), so the
# only thing that matters is moving big, lane-dense tiles with few grid steps.
# ---------------------------------------------------------------------------

_TARGET_TILE_BYTES = 2 << 20   # ~2 MiB / array tile (sized against v7x 64 MiB VMEM)
_VMEM_LIMIT_BYTES = 48 << 20   # explicit scoped VMEM with headroom (all gens)


def _pick_work_shape(B, N):
    """Lane-dense 2-D working shape (R, C) for an elementwise op on (B, N).

    Folds skinny-N layouts into wide multiples of 128 lanes so stores are
    unmasked, while leaving >= 16 rows so the grid can have >= 2 steps
    (lets v7x shard across both TensorCores)."""
    total = B * N
    if total % 128 != 0:
        return B, N                                    # fallback: block C == full N
    widths = [w for w in (4096, 2048, 1024, 512, 256, 128) if total % w == 0]
    for w in widths:                                   # widest C leaving >= 16 rows
        if total // w >= 16:
            return total // w, w
    w = widths[0]
    return total // w, w


def _pick_block_rows(R, row_bytes, target_tile_bytes=_TARGET_TILE_BYTES):
    """Largest row count that divides R, is a multiple of 8 (or == R), keeps
    the per-array tile <= target, and leaves >= 2 grid steps when possible."""
    if R % 8 != 0:
        return R                                       # single full block (always legal)
    cap = max(8, (target_tile_bytes // row_bytes) // 8 * 8)
    divisors = [d for d in range(8, R + 1, 8) if R % d == 0 and d <= cap]
    if not divisors:
        return 8
    multi = [d for d in divisors if R // d >= 2]       # prefer >= 2 steps (megacore)
    return max(multi) if multi else max(divisors)


# ---------------------------------------------------------------------------
# Kernels
# ---------------------------------------------------------------------------

def _potential_step_kernel(x_ref, mem_ref, syn_ref, new_mem_ref, new_syn_ref,
                           *, beta, alpha):
    mem = mem_ref[...]
    syn = syn_ref[...]
    new_mem_ref[...] = beta * mem + syn
    new_syn_ref[...] = alpha * syn + x_ref[...]


def _potential_seq_kernel(x_ref, mem0_ref, syn0_ref, mems_ref, syns_ref,
                          mem_acc, syn_acc, *, beta, alpha):
    t = pl.program_id(1)

    @pl.when(t == 0)
    def _():
        mem_acc[...] = mem0_ref[...].astype(jnp.float32)
        syn_acc[...] = syn0_ref[...].astype(jnp.float32)

    new_mem = beta * mem_acc[...] + syn_acc[...]
    new_syn = alpha * syn_acc[...] + x_ref[0].astype(jnp.float32)

    mems_ref[0] = new_mem.astype(mems_ref.dtype)
    syns_ref[0] = new_syn.astype(syns_ref.dtype)

    mem_acc[...] = new_mem
    syn_acc[...] = new_syn


# ---------------------------------------------------------------------------
# Wrappers
# ---------------------------------------------------------------------------

def potential_neuron_forward(x, h=None, *, beta, alpha):
    """Pallas PotentialNeuron forward for one timestep. x: (B, N)."""
    if h is None:
        # Zero initial state has a closed form: beta*0 + 0 = 0, alpha*0 + x = x.
        return {'mem': jnp.zeros_like(x), 'syn': x}

    B, N = x.shape
    R, C = _pick_work_shape(B, N)
    itemsize = jnp.dtype(x.dtype).itemsize
    block_rows = _pick_block_rows(R, C * itemsize)
    grid = (R // block_rows,)

    x2 = jnp.reshape(x, (R, C))
    mem2 = jnp.reshape(h['mem'], (R, C))
    syn2 = jnp.reshape(h['syn'], (R, C))

    spec = pl.BlockSpec((block_rows, C), lambda i: (i, 0))
    kernel = functools.partial(_potential_step_kernel, beta=beta, alpha=alpha)

    new_mem, new_syn = pl.pallas_call(
        kernel,
        out_shape=(jax.ShapeDtypeStruct((R, C), x.dtype),
                   jax.ShapeDtypeStruct((R, C), x.dtype)),
        grid_spec=pl.GridSpec(
            grid=grid,
            in_specs=[spec, spec, spec],
            out_specs=(spec, spec)),
        # Recurrent state is consumed and re-produced every step: let the new
        # state overwrite the old buffers (no fresh HBM allocations / copies
        # when the caller donates h under jit).
        input_output_aliases={1: 0, 2: 1},
        compiler_params=pltpu.CompilerParams(
            dimension_semantics=("parallel",),
            vmem_limit_bytes=_VMEM_LIMIT_BYTES),
    )(x2, mem2, syn2)

    return {'mem': jnp.reshape(new_mem, (B, N)),
            'syn': jnp.reshape(new_syn, (B, N))}


def potential_neuron_forward_seq(xs, h0=None, *, beta, alpha):
    """T timesteps folded into one kernel; mem/syn stay resident in VMEM.

    xs: (T, B, N). Returns (mems, syns), each (T, B, N): the per-step new_h."""
    T, B, N = xs.shape
    if h0 is None:
        h0 = {'mem': jnp.zeros((B, N), xs.dtype), 'syn': jnp.zeros((B, N), xs.dtype)}

    R, C = _pick_work_shape(B, N)
    itemsize = jnp.dtype(xs.dtype).itemsize
    block_rows = _pick_block_rows(R, C * itemsize)
    n_tiles = R // block_rows

    xs3 = jnp.reshape(xs, (T, R, C))
    mem2 = jnp.reshape(h0['mem'], (R, C))
    syn2 = jnp.reshape(h0['syn'], (R, C))

    x_spec = pl.BlockSpec((1, block_rows, C), lambda i, t: (t, i, 0))
    h_spec = pl.BlockSpec((block_rows, C), lambda i, t: (i, 0))   # constant over t
    out_spec = pl.BlockSpec((1, block_rows, C), lambda i, t: (t, i, 0))

    kernel = functools.partial(_potential_seq_kernel, beta=beta, alpha=alpha)

    mems, syns = pl.pallas_call(
        kernel,
        out_shape=(jax.ShapeDtypeStruct((T, R, C), xs.dtype),
                   jax.ShapeDtypeStruct((T, R, C), xs.dtype)),
        grid_spec=pltpu.PrefetchScalarGridSpec(
            num_scalar_prefetch=0,
            grid=(n_tiles, T),
            in_specs=[x_spec, h_spec, h_spec],
            out_specs=(out_spec, out_spec),
            scratch_shapes=[pltpu.VMEM((block_rows, C), jnp.float32),
                            pltpu.VMEM((block_rows, C), jnp.float32)]),
        compiler_params=pltpu.CompilerParams(
            dimension_semantics=("parallel", "arbitrary"),
            vmem_limit_bytes=_VMEM_LIMIT_BYTES),
    )(xs3, mem2, syn2)

    return jnp.reshape(mems, (T, B, N)), jnp.reshape(syns, (T, B, N))


def potential_neuron_forward_ref(x, h=None, *, beta, alpha):
    """Pure-JAX reference mirroring the PyTorch forward."""
    if h is None:
        h = {'mem': jnp.zeros_like(x), 'syn': jnp.zeros_like(x)}
    return {'mem': beta * h['mem'] + h['syn'],
            'syn': alpha * h['syn'] + x}


if __name__ == "__main__":
    BETA, ALPHA = 0.9, 0.8
    B, N, T = 16, 128, 8

    key = jax.random.PRNGKey(0)
    kx, km, ks, kxs = jax.random.split(key, 4)
    x = jax.random.normal(kx, (B, N), dtype=jnp.float32)
    h0 = {
        'mem': jax.random.normal(km, (B, N), dtype=jnp.float32),
        'syn': 0.5 * jax.random.normal(ks, (B, N), dtype=jnp.float32),
    }
    xs = jax.random.normal(kxs, (T, B, N), dtype=jnp.float32)

    # --- single-step kernel vs reference ---
    new_h = potential_neuron_forward(x, h0, beta=BETA, alpha=ALPHA)
    jax.block_until_ready((new_h['mem'], new_h['syn']))
    ref_h = potential_neuron_forward_ref(x, h0, beta=BETA, alpha=ALPHA)
    assert jnp.allclose(new_h['mem'], ref_h['mem'], atol=1e-6)
    assert jnp.allclose(new_h['syn'], ref_h['syn'], atol=1e-6)

    # --- h=None closed-form path ---
    h_none = potential_neuron_forward(x, None, beta=BETA, alpha=ALPHA)
    ref_none = potential_neuron_forward_ref(x, None, beta=BETA, alpha=ALPHA)
    assert jnp.allclose(h_none['mem'], ref_none['mem'])
    assert jnp.allclose(h_none['syn'], ref_none['syn'])

    # --- time-folded kernel vs scanned reference ---
    mems, syns = potential_neuron_forward_seq(xs, h0, beta=BETA, alpha=ALPHA)
    jax.block_until_ready((mems, syns))
    h = h0
    for t in range(T):
        h = potential_neuron_forward_ref(xs[t], h, beta=BETA, alpha=ALPHA)
        assert jnp.allclose(mems[t], h['mem'], atol=1e-5)
        assert jnp.allclose(syns[t], h['syn'], atol=1e-5)

    print("KERNEL_OK")
</pallas_src>

<mosaic_0001>
module attributes {stable_mosaic.version = 11 : i64} {
  func.func @_potential_step_kernel(%arg0: i32, %arg1: memref<8x128xf32, #tpu.memory_space<vmem>>, %arg2: memref<8x128xf32, #tpu.memory_space<vmem>>, %arg3: memref<8x128xf32, #tpu.memory_space<vmem>>, %arg4: memref<8x128xf32, #tpu.memory_space<vmem>>, %arg5: memref<8x128xf32, #tpu.memory_space<vmem>>) attributes {dimension_semantics = [#tpu.dimension_semantics<parallel>], iteration_bounds = array<i64: 2>, scalar_prefetch = 0 : i64, scratch_operands = 0 : i64, tpu.core_type = #tpu.core_type<tc>, window_params = [{transform_indices = @transform_0, window_bounds = array<i64: 8, 128>}, {transform_indices = @transform_1, window_bounds = array<i64: 8, 128>}, {transform_indices = @transform_2, window_bounds = array<i64: 8, 128>}, {transform_indices = @transform_3, window_bounds = array<i64: 8, 128>}, {transform_indices = @transform_4, window_bounds = array<i64: 8, 128>}]} {
    %c0 = arith.constant 0 : index
    %c0_0 = arith.constant 0 : index
    %0 = vector.load %arg2[%c0, %c0_0] : memref<8x128xf32, #tpu.memory_space<vmem>>, vector<8x128xf32>
    %c0_1 = arith.constant 0 : index
    %c0_2 = arith.constant 0 : index
    %1 = vector.load %arg3[%c0_1, %c0_2] : memref<8x128xf32, #tpu.memory_space<vmem>>, vector<8x128xf32>
    %cst = arith.constant 0.899999976 : f32
    %2 = vector.broadcast %cst : f32 to vector<8x128xf32>
    %3 = arith.mulf %2, %0 : vector<8x128xf32>
    %4 = arith.addf %3, %1 : vector<8x128xf32>
    %c0_3 = arith.constant 0 : index
    %c0_4 = arith.constant 0 : index
    %5 = vector.load %arg4[%c0_3, %c0_4] : memref<8x128xf32, #tpu.memory_space<vmem>>, vector<8x128xf32>
    tpu.vector_store %arg4[%c0_3, %c0_4], %4 {strides = array<i32>} : memref<8x128xf32, #tpu.memory_space<vmem>>, vector<8x128xf32>,
    %cst_5 = arith.constant 8.000000e-01 : f32
    %6 = vector.broadcast %cst_5 : f32 to vector<8x128xf32>
    %7 = arith.mulf %6, %1 : vector<8x128xf32>
    %c0_6 = arith.constant 0 : index
    %c0_7 = arith.constant 0 : index
    %8 = vector.load %arg1[%c0_6, %c0_7] : memref<8x128xf32, #tpu.memory_space<vmem>>, vector<8x128xf32>
    %9 = arith.addf %7, %8 : vector<8x128xf32>
    %c0_8 = arith.constant 0 : index
    %c0_9 = arith.constant 0 : index
    %10 = vector.load %arg5[%c0_8, %c0_9] : memref<8x128xf32, #tpu.memory_space<vmem>>, vector<8x128xf32>
    tpu.vector_store %arg5[%c0_8, %c0_9], %9 {strides = array<i32>} : memref<8x128xf32, #tpu.memory_space<vmem>>, vector<8x128xf32>,
    return
  }
  func.func @transform_0(%arg0: i32) -> (i32, i32) {
    %c0_i32 = arith.constant 0 : i32
    %c0_i32_0 = arith.constant 0 : i32
    return %arg0, %c0_i32 : i32, i32
  }
  func.func @transform_1(%arg0: i32) -> (i32, i32) {
    %c0_i32 = arith.constant 0 : i32
    %c0_i32_0 = arith.constant 0 : i32
    return %arg0, %c0_i32 : i32, i32
  }
  func.func @transform_2(%arg0: i32) -> (i32, i32) {
    %c0_i32 = arith.constant 0 : i32
    %c0_i32_0 = arith.constant 0 : i32
    return %arg0, %c0_i32 : i32, i32
  }
  func.func @transform_3(%arg0: i32) -> (i32, i32) {
    %c0_i32 = arith.constant 0 : i32
    %c0_i32_0 = arith.constant 0 : i32
    return %arg0, %c0_i32 : i32, i32
  }
  func.func @transform_4(%arg0: i32) -> (i32, i32) {
    %c0_i32 = arith.constant 0 : i32
    %c0_i32_0 = arith.constant 0 : i32
    return %arg0, %c0_i32 : i32, i32
  }
}

</mosaic_0001>

<llo_original>
// kernel: tpu_custom_call.1
$region0: #{tpu_custom_call.1}
  #allocation0 [shape = 'u32[]', space=smem, size = 0x4, offset = 0x4, fixed_abs, tag = 'smem constant byte address 0x4 - core index']
  #allocation1 [shape = 'u32[144,128]{1,0:T(1,128)}', space=vmem, size = 0x12000, scoped, tag = 'internal scratch']
  %s0 = inlined_call_operand.vmem [shape: f32[16,128], index: 0, kind: input, shape index: {}]
  %s1 = inlined_call_operand.hbm [shape: f32[16,128], index: 1, kind: input, shape index: {}, may-alias: {1,3}]
  %s2 = inlined_call_operand.hbm [shape: f32[16,128], index: 2, kind: input, shape index: {}, may-alias: {2,4}]
  %s3 = inlined_call_operand.hbm [shape: f32[16,128], index: 3, kind: output, shape index: {0}, may-alias: {1,3}]
  %s4 = inlined_call_operand.hbm [shape: f32[16,128], index: 4, kind: output, shape index: {1}, may-alias: {2,4}]
  %5 = xla_tuple %s3, %s4
  %s6 = sld [smem:[#allocation0]]
  $region61: #{tpu_custom_call.1} parent=0
    _
  %s8 = ssub.s32 1, %s6
  %s9 = scalar_select 0, %s8, %s6
  $region1: #{tpu_custom_call.1} parent=0
    #allocation2 [shape = 'u8[8192]{0}', space=vmem, size = 0x2000, scoped, tag = 'input window, operand 1']
    #allocation3 [shape = 's32[2]{0}', space=sflag, size = 0x8, scoped, tag = 'scoped memory for tpu_custom_call.1']
    #allocation4 [shape = 's32[2]{0}', space=sflag, size = 0x8, scoped, tag = 'scoped memory for tpu_custom_call.1']
    #allocation5 [shape = 'u8[8192]{0}', space=vmem, size = 0x2000, scoped, tag = 'input window, operand 2']
    #allocation6 [shape = 's32[2]{0}', space=sflag, size = 0x8, scoped, tag = 'scoped memory for tpu_custom_call.1']
    #allocation7 [shape = 'u8[8192]{0}', space=vmem, size = 0x2000, scoped, tag = 'output window, operand 0']
    #allocation8 [shape = 'u8[8192]{0}', space=vmem, size = 0x2000, scoped, tag = 'output window, operand 1']
    #allocation9 [shape = 's32[2]{0}', space=sflag, size = 0x8, scoped, tag = 'scoped memory for tpu_custom_call.1']
    %10 = vsyncpa [#allocation3], 0
    %s11 = scalar_lea.sflag [#allocation3], 1
    %12 = vsyncpa %s11, 0
    %13 = vsyncpa [#allocation6], 0
    %s14 = scalar_lea.sflag [#allocation6], 1
    %15 = vsyncpa %s14, 0
    %16 = vsyncpa [#allocation4], 0
    %s17 = scalar_lea.sflag [#allocation4], 1
    %18 = vsyncpa %s17, 0
    %19 = vsyncpa [#allocation9], 0
    %s20 = scalar_lea.sflag [#allocation9], 1
    %21 = vsyncpa %s20, 0
    loop: start=0, step=1, limit=4
    $region2: #{tpu_custom_call.1} parent=1 // loop_pre_header
      _
    $region3: #{tpu_custom_call.1} parent=1 // loop_header
      %s23 = sphi 0, %s27
      %p24 = scmp.ge.s32.totalorder %s23, 4
      %s33 = sphi 0, %s35
      %s36 = sphi 0, %s33
      %s37 = sphi 0, %s36
      %s53 = sphi 0, %s37
      %s59 = sphi 0, %s61
      %s62 = sphi 0, %s59
      %s63 = sphi 0, %s62
      %s79 = sphi 0, %s63
      %s85 = sphi 0, %s87
      %s88 = sphi 0, %s85
      %s89 = sphi 0, %s88
      %s105 = sphi 0, %s89
      %s111 = sphi 0, %s113
      %s114 = sphi 0, %s111
      %s115 = sphi 0, %s114
      %s131 = sphi 0, %s115
      %s137 = sphi 0, %s139
      %s140 = sphi 0, %s137
      %s141 = sphi 0, %s140
      %s157 = sphi 0, %s141
    $region4: #{tpu_custom_call.1} parent=1 // loop_header_branch
      %26 = sbr.rel (%p24) target = $region8
    $region5: #{tpu_custom_call.1} parent=1 // loop_body
      %s28 = ssub.s32 %s23, 1
      %s29 = ssub.s32 %s23, 2
      %s30 = sadd.s32 %s23, 1
      %s31 = ssub.s32 %s23, %s30
      %p32 = scmp.eq.s32.totalorder %s31, 0
      %s34 = sadd.s32 %s33, 1
      %s35 = scalar_select %p32, %s33, %s34
      %p38 = pneg %p32
      %p39 = scmp.eq.s32.totalorder %s23, 1
      %p40 = por %p38, %p39
      %p41 = scmp.ne.s32.totalorder %s33, %s36
      %p42 = scmp.eq.s32.totalorder %s23, 0
      %p43 = por %p41, %p42
      %p44 = scmp.ne.s32.totalorder %s33, %s36
      %p45 = scmp.eq.s32.totalorder %s28, 1
      %p46 = por %p44, %p45
      %p47 = scmp.ne.s32.totalorder %s36, %s37
      %p48 = scmp.eq.s32.totalorder %s28, 0
      %p49 = por %p47, %p48
      %p50 = scmp.ne.s32.totalorder %s36, %s37
      %p51 = scmp.eq.s32.totalorder %s29, 1
      %p52 = por %p50, %p51
      %p54 = scmp.ne.s32.totalorder %s37, %s53
      %p55 = scmp.eq.s32.totalorder %s29, 0
      %p56 = por %p54, %p55
      %s57 = ssub.s32 %s23, %s30
      %p58 = scmp.eq.s32.totalorder %s57, 0
      %s60 = sadd.s32 %s59, 1
      %s61 = scalar_select %p58, %s59, %s60
      %p64 = pneg %p58
      %p65 = scmp.eq.s32.totalorder %s23, 1
      %p66 = por %p64, %p65
      %p67 = scmp.ne.s32.totalorder %s59, %s62
      %p68 = scmp.eq.s32.totalorder %s23, 0
      %p69 = por %p67, %p68
      %p70 = scmp.ne.s32.totalorder %s59, %s62
      %p71 = scmp.eq.s32.totalorder %s28, 1
      %p72 = por %p70, %p71
      %p73 = scmp.ne.s32.totalorder %s62, %s63
      %p74 = scmp.eq.s32.totalorder %s28, 0
      %p75 = por %p73, %p74
      %p76 = scmp.ne.s32.totalorder %s62, %s63
      %p77 = scmp.eq.s32.totalorder %s29, 1
      %p78 = por %p76, %p77
      %p80 = scmp.ne.s32.totalorder %s63, %s79
      %p81 = scmp.eq.s32.totalorder %s29, 0
      %p82 = por %p80, %p81
      %s83 = ssub.s32 %s23, %s30
      %p84 = scmp.eq.s32.totalorder %s83, 0
      %s86 = sadd.s32 %s85, 1
      %s87 = scalar_select %p84, %s85, %s86
      %p90 = pneg %p84
      %p91 = scmp.eq.s32.totalorder %s23, 1
      %p92 = por %p90, %p91
      %p93 = scmp.ne.s32.totalorder %s85, %s88
      %p94 = scmp.eq.s32.totalorder %s23, 0
      %p95 = por %p93, %p94
      %p96 = scmp.ne.s32.totalorder %s85, %s88
      %p97 = scmp.eq.s32.totalorder %s28, 1
      %p98 = por %p96, %p97
      %p99 = scmp.ne.s32.totalorder %s88, %s89
      %p100 = scmp.eq.s32.totalorder %s28, 0
      %p101 = por %p99, %p100
      %p102 = scmp.ne.s32.totalorder %s88, %s89
      %p103 = scmp.eq.s32.totalorder %s29, 1
      %p104 = por %p102, %p103
      %p106 = scmp.ne.s32.totalorder %s89, %s105
      %p107 = scmp.eq.s32.totalorder %s29, 0
      %p108 = por %p106, %p107
      %s109 = ssub.s32 %s23, %s30
      %p110 = scmp.eq.s32.totalorder %s109, 0
      %s112 = sadd.s32 %s111, 1
      %s113 = scalar_select %p110, %s111, %s112
      %p116 = pneg %p110
      %p117 = scmp.eq.s32.totalorder %s23, 1
      %p118 = por %p116, %p117
      %p119 = scmp.ne.s32.totalorder %s111, %s114
      %p120 = scmp.eq.s32.totalorder %s23, 0
      %p121 = por %p119, %p120
      %p122 = scmp.ne.s32.totalorder %s111, %s114
      %p123 = scmp.eq.s32.totalorder %s28, 1
      %p124 = por %p122, %p123
      %p125 = scmp.ne.s32.totalorder %s114, %s115
      %p126 = scmp.eq.s32.totalorder %s28, 0
      %p127 = por %p125, %p126
      %p128 = scmp.ne.s32.totalorder %s114, %s115
      %p129 = scmp.eq.s32.totalorder %s29, 1
      %p130 = por %p128, %p129
      %p132 = scmp.ne.s32.totalorder %s115, %s131
      %p133 = scmp.eq.s32.totalorder %s29, 0
      %p134 = por %p132, %p133
      %s135 = ssub.s32 %s23, %s30
      %p136 = scmp.eq.s32.totalorder %s135, 0
      %s138 = sadd.s32 %s137, 1
      %s139 = scalar_select %p136, %s137, %s138
      %p142 = pneg %p136
      %p143 = scmp.eq.s32.totalorder %s23, 1
      %p144 = por %p142, %p143
      %p145 = scmp.ne.s32.totalorder %s137, %s140
      %p146 = scmp.eq.s32.totalorder %s23, 0
      %p147 = por %p145, %p146
      %p148 = scmp.ne.s32.totalorder %s137, %s140
      %p149 = scmp.eq.s32.totalorder %s28, 1
      %p150 = por %p148, %p149
      %p151 = scmp.ne.s32.totalorder %s140, %s141
      %p152 = scmp.eq.s32.totalorder %s28, 0
      %p153 = por %p151, %p152
      %p154 = scmp.ne.s32.totalorder %s140, %s141
      %p155 = scmp.eq.s32.totalorder %s29, 1
      %p156 = por %p154, %p155
      %p158 = scmp.ne.s32.totalorder %s141, %s157
      %p159 = scmp.eq.s32.totalorder %s29, 0
      %p160 = por %p158, %p159
      %p161 = scmp.le.s32.totalorder 1, %s23
      %p162 = scmp.lt.s32.totalorder %s23, 3
      %p163 = pnand %p161, %p162
      %p164 = pneg %p163
      // Predicated region
      $region9: #{tpu_custom_call.1} parent=5 // pred_check
        _
      $region10: #{tpu_custom_call.1} parent=5 // pred_check_branch
        %166 = sbr.rel (%p163) target = $region12
      $region11: #{tpu_custom_call.1} parent=5 // pred_region
        %s167 = ssub.s32 %s23, 1
      $region12: #{tpu_custom_call.1} parent=5 // pred_fallthru
        _
      %p168 = scmp.lt.s32.totalorder %s23, 2
      // Predicated region
      $region13: #{tpu_custom_call.1} parent=5 // pred_check
        %p169 = pneg %p168
      $region14: #{tpu_custom_call.1} parent=5 // pred_check_branch
        %171 = sbr.rel (%p169) target = $region16
      $region15: #{tpu_custom_call.1} parent=5 // pred_region
        // Predicated region
        $region17: #{tpu_custom_call.1} parent=15 // pred_check
          %p172 = pneg %p43
        $region18: #{tpu_custom_call.1} parent=15 // pred_check_branch
          %174 = sbr.rel (%p172) target = $region20
        $region19: #{tpu_custom_call.1} parent=15 // pred_region
          %p175 = scmp.lt.s32.totalorder %s23, 1
          %s176 = scalar_select %p175, %s23, 1
          %s177 = smul.addr %s176, 8
          %s178 = scalar_lea.vmem %s0, %s177
        $region20: #{tpu_custom_call.1} parent=15 // pred_fallthru
          _
        // Predicated region
        $region21: #{tpu_custom_call.1} parent=15 // pred_check
          %p179 = pneg %p69
        $region22: #{tpu_custom_call.1} parent=15 // pred_check_branch
          %181 = sbr.rel (%p179) target = $region24
        $region23: #{tpu_custom_call.1} parent=15 // pred_region
          %s182 = sand.u32 %s59, 1
          %s183 = scalar_lea.sflag [#allocation3], %s182
          %s184 = sand.u32 %s59, 1
          %s185 = smul.addr %s184, 8
          %s186 = scalar_lea.vmem [#allocation2], %s185
          %s188 = ssub.s32 128, 128
          %189 = vsyncadd %s183, %s188
          %s190 = smul.addr %s23, 128
          %s191 = scalar_lea.hbm %s1, %s190
          %s193 = sshll.u32 %s186, 4
          %s194 = int_to_ptr.vmem [resolvable:$true] %s193
          %196 = dma.hbm_to_vmem [thread:$0]  %s191, 128, %s194, %s183
        $region24: #{tpu_custom_call.1} parent=15 // pred_fallthru
          _
        // Predicated region
        $region25: #{tpu_custom_call.1} parent=15 // pred_check
          %p197 = pneg %p95
        $region26: #{tpu_custom_call.1} parent=15 // pred_check_branch
          %199 = sbr.rel (%p197) target = $region28
        $region27: #{tpu_custom_call.1} parent=15 // pred_region
          %s200 = sand.u32 %s85, 1
          %s201 = scalar_lea.sflag [#allocation6], %s200
          %s202 = sand.u32 %s85, 1
          %s203 = smul.addr %s202, 8
          %s204 = scalar_lea.vmem [#allocation5], %s203
          %s206 = ssub.s32 128, 128
          %207 = vsyncadd %s201, %s206
          %s208 = smul.addr %s23, 128
          %s209 = scalar_lea.hbm %s2, %s208
          %s211 = sshll.u32 %s204, 4
          %s212 = int_to_ptr.vmem [resolvable:$true] %s211
          %214 = dma.hbm_to_vmem [thread:$0]  %s209, 128, %s212, %s201
        $region28: #{tpu_custom_call.1} parent=15 // pred_fallthru
          _
      $region16: #{tpu_custom_call.1} parent=5 // pred_fallthru
        _
      %p215 = scmp.le.s32.totalorder 1, %s23
      %p216 = scmp.lt.s32.totalorder %s23, 3
      %p217 = pnand %p215, %p216
      %p218 = pneg %p217
      // Predicated region
      $region29: #{tpu_custom_call.1} parent=5 // pred_check
        _
      $region30: #{tpu_custom_call.1} parent=5 // pred_check_branch
        %220 = sbr.rel (%p217) target = $region32
      $region31: #{tpu_custom_call.1} parent=5 // pred_region
        %s221 = ssub.s32 %s23, 1
        %s222 = sand.u32 %s62, 1
        %s223 = scalar_lea.sflag [#allocation3], %s222
        %s224 = sand.u32 %s62, 1
        %s225 = smul.addr %s224, 8
        %s226 = scalar_lea.vmem [#allocation2], %s225
        // Predicated region
        $region33: #{tpu_custom_call.1} parent=31 // pred_check
          %p227 = pneg %p75
        $region34: #{tpu_custom_call.1} parent=31 // pred_check_branch
          %229 = sbr.rel (%p227) target = $region36
        $region35: #{tpu_custom_call.1} parent=31 // pred_region
          %230 = dma.done %s223, 128
        $region36: #{tpu_custom_call.1} parent=31 // pred_fallthru
          _
        %s231 = sand.u32 %s88, 1
        %s232 = scalar_lea.sflag [#allocation6], %s231
        %s233 = sand.u32 %s88, 1
        %s234 = smul.addr %s233, 8
        %s235 = scalar_lea.vmem [#allocation5], %s234
        // Predicated region
        $region37: #{tpu_custom_call.1} parent=31 // pred_check
          %p236 = pneg %p101
        $region38: #{tpu_custom_call.1} parent=31 // pred_check_branch
          %238 = sbr.rel (%p236) target = $region40
        $region39: #{tpu_custom_call.1} parent=31 // pred_region
          %239 = dma.done %s232, 128
        $region40: #{tpu_custom_call.1} parent=31 // pred_fallthru
          _
        %p240 = scmp.lt.s32.totalorder %s28, 1
        %s241 = scalar_select %p240, %s28, 1
        %s242 = smul.addr %s241, 8
        %s243 = scalar_lea.vmem %s0, %s242
        %p244 = pneg %p49
        %p245 = pneg %p46
        %s246 = sand.u32 %s62, 1
        %s247 = scalar_lea.sflag [#allocation3], %s246
        %s248 = sand.u32 %s62, 1
        %s249 = smul.addr %s248, 8
        %s250 = scalar_lea.vmem [#allocation2], %s249
        %p251 = pneg %p75
        %p252 = pneg %p72
        %s253 = sand.u32 %s88, 1
        %s254 = scalar_lea.sflag [#allocation6], %s253
        %s255 = sand.u32 %s88, 1
        %s256 = smul.addr %s255, 8
        %s257 = scalar_lea.vmem [#allocation5], %s256
        %p258 = pneg %p101
        %p259 = pneg %p98
        %p260 = pneg %p127
        %p261 = pneg %p124
        %s262 = sand.u32 %s114, 1
        %s263 = scalar_lea.sflag [#allocation4], %s262
        %s264 = sand.u32 %s114, 1
        %s265 = smul.addr %s264, 8
        %s266 = scalar_lea.vmem [#allocation7], %s265
        %p267 = pneg %p153
        %p268 = pneg %p150
        %s269 = sand.u32 %s140, 1
        %s270 = scalar_lea.sflag [#allocation9], %s269
        %s271 = sand.u32 %s140, 1
        %s272 = smul.addr %s271, 8
        %s273 = scalar_lea.vmem [#allocation8], %s272
        %p274 = scmp.lt.s32.totalorder %s28, 1
        %s275 = scalar_select %p274, %s28, 1
        %s276 = smul.addr %s275, 8
        %s277 = scalar_lea.vmem %s0, %s276
        %v278 = vld [vmem:[%s226] sm:$0xff]
        %v279 = vld [vmem:[%s235] sm:$0xff]
        %v280 = vmul.f32 %v278, 0.9
        %v281 = vadd.f32 %v280, %v279
        %282 = vst [vmem:[%s266] sm:$0xff] %v281
        %v283 = vmul.f32 %v279, 0.8
        %v284 = vld [vmem:[%s277] sm:$0xff]
        %v285 = vadd.f32 %v283, %v284
        %286 = vst [vmem:[%s273] sm:$0xff] %v285
        %s287 = sand.u32 %s114, 1
        %s288 = scalar_lea.sflag [#allocation4], %s287
        %s289 = sand.u32 %s114, 1
        %s290 = smul.addr %s289, 8
        %s291 = scalar_lea.vmem [#allocation7], %s290
        %s292 = sand.u32 %s140, 1
        %s293 = scalar_lea.sflag [#allocation9], %s292
        %s294 = sand.u32 %s140, 1
        %s295 = smul.addr %s294, 8
        %s296 = scalar_lea.vmem [#allocation8], %s295
        // Predicated region
        $region41: #{tpu_custom_call.1} parent=31 // pred_check
          %p297 = pneg %p124
        $region42: #{tpu_custom_call.1} parent=31 // pred_check_branch
          %299 = sbr.rel (%p297) target = $region44
        $region43: #{tpu_custom_call.1} parent=31 // pred_region
          %s301 = ssub.s32 128, 128
          %302 = vsyncadd %s288, %s301
          %s303 = smul.addr %s28, 128
          %s304 = scalar_lea.hbm %s3, %s303
          %s306 = sshll.u32 %s291, 4
          %s307 = int_to_ptr.vmem [resolvable:$true] %s306
          %309 = dma.vmem_to_hbm [thread:$0]  %s307, 128, %s304, %s288
        $region44: #{tpu_custom_call.1} parent=31 // pred_fallthru
          _
        // Predicated region
        $region45: #{tpu_custom_call.1} parent=31 // pred_check
          %p310 = pneg %p150
        $region46: #{tpu_custom_call.1} parent=31 // pred_check_branch
          %312 = sbr.rel (%p310) target = $region48
        $region47: #{tpu_custom_call.1} parent=31 // pred_region
          %s314 = ssub.s32 128, 128
          %315 = vsyncadd %s293, %s314
          %s316 = smul.addr %s28, 128
          %s317 = scalar_lea.hbm %s4, %s316
          %s319 = sshll.u32 %s296, 4
          %s320 = int_to_ptr.vmem [resolvable:$true] %s319
          %322 = dma.vmem_to_hbm [thread:$0]  %s320, 128, %s317, %s293
        $region48: #{tpu_custom_call.1} parent=31 // pred_fallthru
          _
      $region32: #{tpu_custom_call.1} parent=5 // pred_fallthru
        _
      %p323 = scmp.le.s32.totalorder 2, %s23
      // Predicated region
      $region49: #{tpu_custom_call.1} parent=5 // pred_check
        %p324 = pneg %p323
      $region50: #{tpu_custom_call.1} parent=5 // pred_check_branch
        %326 = sbr.rel (%p324) target = $region52
      $region51: #{tpu_custom_call.1} parent=5 // pred_region
        %s327 = ssub.s32 %s23, 2
        // Predicated region
        $region53: #{tpu_custom_call.1} parent=51 // pred_check
          %p328 = pneg %p130
        $region54: #{tpu_custom_call.1} parent=51 // pred_check_branch
          %330 = sbr.rel (%p328) target = $region56
        $region55: #{tpu_custom_call.1} parent=51 // pred_region
          %s331 = sand.u32 %s115, 1
          %s332 = scalar_lea.sflag [#allocation4], %s331
          %s333 = sand.u32 %s115, 1
          %s334 = smul.addr %s333, 8
          %s335 = scalar_lea.vmem [#allocation7], %s334
          %336 = dma.done %s332, 128
        $region56: #{tpu_custom_call.1} parent=51 // pred_fallthru
          _
        // Predicated region
        $region57: #{tpu_custom_call.1} parent=51 // pred_check
          %p337 = pneg %p156
        $region58: #{tpu_custom_call.1} parent=51 // pred_check_branch
          %339 = sbr.rel (%p337) target = $region60
        $region59: #{tpu_custom_call.1} parent=51 // pred_region
          %s340 = sand.u32 %s141, 1
          %s341 = scalar_lea.sflag [#allocation9], %s340
          %s342 = sand.u32 %s141, 1
          %s343 = smul.addr %s342, 8
          %s344 = scalar_lea.vmem [#allocation8], %s343
          %345 = dma.done %s341, 128
        $region60: #{tpu_custom_call.1} parent=51 // pred_fallthru
          _
      $region52: #{tpu_custom_call.1} parent=5 // pred_fallthru
        _
    $region6: #{tpu_custom_call.1} parent=1 // loop_footer
      %s27 = sadd.s32 1, %s23
    $region7: #{tpu_custom_call.1} parent=1 // loop_footer_branch
      %22 = sbr.rel target = $region3
    $region8: #{tpu_custom_call.1} parent=1 // loop_exit
      _
    %346 = vsyncpa [#allocation3], 1
    %s347 = scalar_lea.sflag [#allocation3], 1
    %348 = vsyncpa %s347, 1
    %349 = vsyncpa [#allocation6], 1
    %s350 = scalar_lea.sflag [#allocation6], 1
    %351 = vsyncpa %s350, 1
    %352 = vsyncpa [#allocation4], 1
    %s353 = scalar_lea.sflag [#allocation4], 1
    %354 = vsyncpa %s353, 1
    %355 = vsyncpa [#allocation9], 1
    %s356 = scalar_lea.sflag [#allocation9], 1
    %357 = vsyncpa %s356, 1

</llo_original>
